<compile_context>
chip_gen: v6e
topology: v6e:2x2x1
jax: 0.10.0
libtpu: 0.0.40
codegen_flags: <defaults>
</compile_context>

<pallas_src>
import functools

import jax
import jax.numpy as jnp
from jax import lax
from jax.experimental import pallas as pl
from jax.experimental.pallas import tpu as pltpu


# ----------------------------- Pallas kernel ------------------------------ #
def _encoder_conv_kernel(frames_ref, w_ref, bias_ref, out_ref):
    # frames_ref: (K, TL)  frames for this output tile (frame index on lanes)
    # w_ref:      (N, K)   Conv1d weight, resident (constant index map)
    # bias_ref:   (N, 1)   resident, float32
    # out_ref:    (N, TL)  lane-dense tile of the [B, N, L] output
    acc = jnp.dot(w_ref[...], frames_ref[...], preferred_element_type=jnp.float32)
    acc = acc + bias_ref[...]
    # TODO(synk): fuse the model's next elementwise stage (ReLU / gate / scale)
    # here if one follows the Encoder; Encoder.forward itself ends at the conv.
    out_ref[...] = acc.astype(out_ref.dtype)


# ------------------------------ tile sizing -------------------------------- #
def _pick_tile_l(N, K, L, B, tile_l, out_bytes, in_bytes):
    """Pick the L-tile width (multiple of 128) for the lane axis."""
    full = max(128, (L // 128) * 128) if L >= 128 else 128
    if tile_l is None:
        # Target ~3 MiB output tile so per-grid-step overhead is amortized and
        # per-row DMA bursts are >= 8 KB.
        TL = (3 * 1024 * 1024) // (out_bytes * N)
        TL = max(512, min(4096, TL))
        # VMEM guard: double-buffered output + frames tiles must stay well under
        # the 16 MiB default scoped VMEM of v5e (also safe on v7x's 32-of-64 MiB).
        budget = 12 * 1024 * 1024
        while TL > 512 and 2 * TL * (N * out_bytes + K * in_bytes) > budget:
            TL -= 512
    else:
        TL = tile_l
    TL = max(128, (TL // 128) * 128)
    TL = min(TL, full)                      # never exceed the (rounded) L extent
    if B == 1 and L >= 256:                 # keep >= 2 grid points for v7x megacore
        TL = min(TL, max(128, ((L // 2) // 128) * 128))
    return TL


# ------------------------------ Encoder wrapper ---------------------------- #
@functools.partial(
    jax.jit, static_argnames=("kernel_size", "tile_l", "compute_dtype", "out_dtype"))
def encoder_forward(x, weight, bias, *, kernel_size, tile_l=None,
                    compute_dtype=jnp.float32, out_dtype=jnp.float32):
    """
    x:      [B, T]     (float32)
    weight: [N, 1, K]  (Conv1d weight, PyTorch OIH layout)
    bias:   [N]
    returns [B, N, L] with L = T // (K//2) + 1   (requires T % (K//2) == 0)

    compute_dtype: dtype of frames/weight fed to the MXU (accumulation is f32).
    out_dtype:     dtype written to HBM (bf16 halves the dominant byte stream).
    """
    B, T = x.shape
    N = weight.shape[0]
    K = kernel_size
    S = K // 2
    assert weight.shape[1] == 1 and weight.shape[2] == K
    assert K % 2 == 0 and T % S == 0
    L = T // S + 1

    cdt = jnp.dtype(compute_dtype)
    odt = jnp.dtype(out_dtype)
    TL = _pick_tile_l(N, K, L, B, tile_l, odt.itemsize, cdt.itemsize)
    NLT = pl.cdiv(L, TL)          # number of L tiles
    Lp = max(L, TL)               # > L only when L < 128 (tiny slice at the end)

    # One fused pad of the signal: left pad S (conv padding) and right pad so
    # every frame of every input block is fully in-bounds.
    CPA = NLT * TL                                        # frames per batch row
    total = (CPA + 1) * S
    x_pad = jnp.pad(x.astype(cdt), ((0, 0), (S, total - T - S)))   # [B, total]

    # frames[b, k, l] = x_pad[b, l*S + k]; built from two non-overlapping chunk
    # views and transposed so the (large) frame axis lands on the 128 lanes.
    fa = x_pad[:, : CPA * S].reshape(B, CPA, S)
    fb = x_pad[:, S: (CPA + 1) * S].reshape(B, CPA, S)
    frames = jnp.concatenate([fa, fb], axis=2).transpose(0, 2, 1)   # [B, K, CPA]

    w = weight.reshape(N, K).astype(cdt)                  # single (N, K) weight
    bias_col = bias.reshape(N, 1).astype(jnp.float32)

    out = pl.pallas_call(
        _encoder_conv_kernel,
        out_shape=jax.ShapeDtypeStruct((B, N, Lp), odt),
        grid=(B, NLT),
        in_specs=[
            pl.BlockSpec((None, K, TL), lambda b, lt: (b, 0, lt)),   # frames tile
            pl.BlockSpec((N, K), lambda b, lt: (0, 0)),              # W (resident)
            pl.BlockSpec((N, 1), lambda b, lt: (0, 0)),              # bias (resident)
        ],
        out_specs=pl.BlockSpec((None, N, TL), lambda b, lt: (b, 0, lt)),
        compiler_params=pltpu.CompilerParams(
            dimension_semantics=("parallel", "parallel")),
    )(frames, w, bias_col)

    if Lp != L:                   # only when L < 128 (tiny copy)
        out = out[:, :, :L]
    return out


# ------------------------------ reference (lax) ---------------------------- #
def encoder_reference(x, weight, bias, *, kernel_size):
    S = kernel_size // 2
    out = lax.conv_general_dilated(
        x[:, None, :].astype(jnp.float32),                # [B, 1, T]
        weight.astype(jnp.float32),                       # [N, 1, K]
        window_strides=(S,),
        padding=[(S, S)],
        dimension_numbers=("NCH", "OIH", "NCH"),
        precision=lax.Precision.HIGHEST,
    )
    return out + bias.reshape(1, -1, 1)


if __name__ == "__main__":
    # Small, module-consistent shapes: B=2, N=128 features, K=16 (S=8),
    # T = 2048 -> L = 257 (exercises multiple L tiles and a ragged last tile).
    B, T = 2, 2048
    N, K = 128, 16

    key = jax.random.PRNGKey(0)
    kx, kw, kb = jax.random.split(key, 3)
    x = jax.random.normal(kx, (B, T), dtype=jnp.float32)
    bound = 1.0 / jnp.sqrt(1.0 * K)     # Conv1d-like uniform init
    weight = jax.random.uniform(kw, (N, 1, K), minval=-bound, maxval=bound,
                                dtype=jnp.float32)
    bias = jax.random.uniform(kb, (N,), minval=-bound, maxval=bound,
                              dtype=jnp.float32)

    L = T // (K // 2) + 1
    ref = encoder_reference(x, weight, bias, kernel_size=K)

    # 1) exact-parity path (f32 in / f32 out); small tile to exercise
    #    multi-tile + ragged-last-tile handling.
    out_f32 = encoder_forward(x, weight, bias, kernel_size=K, tile_l=128)
    out_f32 = jax.block_until_ready(out_f32)
    assert out_f32.shape == ref.shape == (B, N, L), (out_f32.shape, ref.shape)
    err_f32 = float(jnp.max(jnp.abs(out_f32 - ref)))
    assert jnp.allclose(out_f32, ref, atol=2e-4, rtol=2e-4), err_f32

    # 2) bandwidth-optimized path (bf16 frames/weight + bf16 output, f32 MXU
    #    accumulation), adaptive tile sizing.
    out_bf16 = encoder_forward(x, weight, bias, kernel_size=K,
                               compute_dtype=jnp.bfloat16,
                               out_dtype=jnp.bfloat16)
    out_bf16 = jax.block_until_ready(out_bf16)
    assert out_bf16.shape == (B, N, L) and out_bf16.dtype == jnp.bfloat16
    err_bf16 = float(jnp.max(jnp.abs(out_bf16.astype(jnp.float32) - ref)))
    assert jnp.allclose(out_bf16.astype(jnp.float32), ref,
                        atol=5e-2, rtol=5e-2), err_bf16

    print("KERNEL_OK")
</pallas_src>

<mosaic_0001>
module attributes {stable_mosaic.version = 11 : i64} {
  func.func @_encoder_conv_kernel(%arg0: i32, %arg1: i32, %arg2: memref<1x16x128xf32, #tpu.memory_space<vmem>>, %arg3: memref<128x16xf32, #tpu.memory_space<vmem>>, %arg4: memref<128x1xf32, #tpu.memory_space<vmem>>, %arg5: memref<1x128x128xf32, #tpu.memory_space<vmem>>) attributes {dimension_semantics = [#tpu.dimension_semantics<parallel>, #tpu.dimension_semantics<parallel>], iteration_bounds = array<i64: 2, 3>, scalar_prefetch = 0 : i64, scratch_operands = 0 : i64, tpu.core_type = #tpu.core_type<tc>, window_params = [{transform_indices = @transform_0, window_bounds = array<i64: 1, 16, 128>}, {pipeline_mode = #tpu.pipeline_mode<synchronous>, transform_indices = @transform_1, window_bounds = array<i64: 128, 16>}, {pipeline_mode = #tpu.pipeline_mode<synchronous>, transform_indices = @transform_2, window_bounds = array<i64: 128, 1>}, {transform_indices = @transform_3, window_bounds = array<i64: 1, 128, 128>}]} {
    %c0 = arith.constant 0 : index
    %c0_0 = arith.constant 0 : index
    %0 = vector.load %arg3[%c0, %c0_0] : memref<128x16xf32, #tpu.memory_space<vmem>>, vector<128x16xf32>
    %c0_1 = arith.constant 0 : index
    %c0_2 = arith.constant 0 : index
    %c0_3 = arith.constant 0 : index
    %1 = vector.load %arg2[%c0_1, %c0_2, %c0_3] : memref<1x16x128xf32, #tpu.memory_space<vmem>>, vector<1x16x128xf32>
    %2 = vector.shape_cast %1 : vector<1x16x128xf32> to vector<16x128xf32>
    %cst = arith.constant dense<0.000000e+00> : vector<128x128xf32>
    %3 = tpu.matmul %0, %2, %cst {dimension_numbers = #tpu.dot_dimension_numbers<[1], [0], [0], [1], [0, 0, 1, 1], [], []>} : vector<128x16xf32>, vector<16x128xf32>, vector<128x128xf32> -> vector<128x128xf32>
    %c0_4 = arith.constant 0 : index
    %c0_5 = arith.constant 0 : index
    %4 = vector.load %arg4[%c0_4, %c0_5] : memref<128x1xf32, #tpu.memory_space<vmem>>, vector<128x1xf32>
    %5 = vector.broadcast %4 : vector<128x1xf32> to vector<128x128xf32>
    %6 = arith.addf %3, %5 : vector<128x128xf32>
    %c0_6 = arith.constant 0 : index
    %c0_7 = arith.constant 0 : index
    %c0_8 = arith.constant 0 : index
    %7 = vector.load %arg5[%c0_6, %c0_7, %c0_8] : memref<1x128x128xf32, #tpu.memory_space<vmem>>, vector<1x128x128xf32>
    %8 = vector.shape_cast %7 : vector<1x128x128xf32> to vector<128x128xf32>
    %9 = vector.shape_cast %6 : vector<128x128xf32> to vector<1x128x128xf32>
    tpu.vector_store %arg5[%c0_6, %c0_7, %c0_8], %9 {strides = array<i32>} : memref<1x128x128xf32, #tpu.memory_space<vmem>>, vector<1x128x128xf32>,
    return
  }
  func.func @transform_0(%arg0: i32, %arg1: i32) -> (i32, i32, i32) {
    %c0_i32 = arith.constant 0 : i32
    %c0_i32_0 = arith.constant 0 : i32
    return %arg0, %c0_i32, %arg1 : i32, i32, i32
  }
  func.func @transform_1(%arg0: i32, %arg1: i32) -> (i32, i32) {
    %c0_i32 = arith.constant 0 : i32
    %c0_i32_0 = arith.constant 0 : i32
    %c0_i32_1 = arith.constant 0 : i32
    return %c0_i32, %c0_i32_0 : i32, i32
  }
  func.func @transform_2(%arg0: i32, %arg1: i32) -> (i32, i32) {
    %c0_i32 = arith.constant 0 : i32
    %c0_i32_0 = arith.constant 0 : i32
    %c0_i32_1 = arith.constant 0 : i32
    return %c0_i32, %c0_i32_0 : i32, i32
  }
  func.func @transform_3(%arg0: i32, %arg1: i32) -> (i32, i32, i32) {
    %c0_i32 = arith.constant 0 : i32
    %c0_i32_0 = arith.constant 0 : i32
    return %arg0, %c0_i32, %arg1 : i32, i32, i32
  }
}

</mosaic_0001>

<llo_original>
// kernel: encoder_forward.1
$region0: #{encoder_forward.1}
  #allocation0 [shape = 'u32[]', space=smem, size = 0x4, offset = 0x4, fixed_abs, tag = 'smem constant byte address 0x4 - core index']
  #allocation1 [shape = 'u32[144,128]{1,0:T(1,128)}', space=vmem, size = 0x12000, scoped, tag = 'internal scratch']
  %s0 = inlined_call_operand.vmem [shape: f32[2,16,384], index: 0, kind: input, shape index: {}]
  %s1 = inlined_call_operand.vmem [shape: f32[128,16], index: 1, kind: input, shape index: {}]
  %s2 = inlined_call_operand.vmem [shape: f32[128,1], index: 2, kind: input, shape index: {}]
  %s3 = inlined_call_operand.vmem [shape: f32[2,128,257], index: 3, kind: output, shape index: {}]
  %s4 = sld [smem:[#allocation0]]
  $region117: #{encoder_forward.1} parent=0
    _
  %s6 = ssub.s32 1, %s4
  %s7 = scalar_select 0, %s6, %s4
  $region1: #{encoder_forward.1} parent=0
    #allocation2 [shape = 'u8[16384]{0}', space=vmem, size = 0x4000, scoped, tag = 'input window, operand 0']
    #allocation3 [shape = 'u8[131072]{0}', space=vmem, size = 0x20000, scoped, tag = 'output window, operand 0']
    loop: start=0, step=1, limit=8
    $region2: #{encoder_forward.1} parent=1 // loop_pre_header
      _
    $region3: #{encoder_forward.1} parent=1 // loop_header
      %s9 = sphi 0, %s13
      %p10 = scmp.ge.s32.totalorder %s9, 8
      %s16 = sphi 0, %s28
      %s17 = sphi 0, %s24
      %s18 = sphi 0, %s16
      %s19 = sphi 0, %s17
      %s20 = sphi 0, %s18
      %s21 = sphi 0, %s19
      %s33 = sphi 0, %s35
      %s36 = sphi 0, %s33
      %s37 = sphi 0, %s36
      %s53 = sphi 0, %s37
      %s57 = sphi 0, %s57
      %s59 = sphi 0, %s57
      %s60 = sphi 0, %s59
      %s74 = sphi 0, %s60
      %s78 = sphi 0, %s78
      %s80 = sphi 0, %s78
      %s81 = sphi 0, %s80
      %s95 = sphi 0, %s81
      %s103 = sphi 0, %s105
      %s106 = sphi 0, %s103
      %s107 = sphi 0, %s106
      %s123 = sphi 0, %s107
    $region4: #{encoder_forward.1} parent=1 // loop_header_branch
      %12 = sbr.rel (%p10) target = $region8
    $region5: #{encoder_forward.1} parent=1 // loop_body
      %s14 = ssub.s32 %s9, 1
      %s15 = ssub.s32 %s9, 2
      %s22 = sadd.s32 1, %s17
      %p23 = scmp.ge.s32.totalorder %s22, 3
      %s24 = scalar_select %p23, 0, %s22
      %s25 = sadd.s32 1, %s16
      %s26 = scalar_select %p23, %s25, %s16
      %p27 = scmp.ge.s32.totalorder %s26, 2
      %s28 = scalar_select %p27, 0, %s26
      %s29 = ssub.s32 %s16, %s28
      %s30 = ssub.s32 %s17, %s24
      %s31 = sor.u32 %s29, %s30
      %p32 = scmp.eq.s32.totalorder %s31, 0
      %s34 = sadd.s32 %s33, 1
      %s35 = scalar_select %p32, %s33, %s34
      %p38 = pneg %p32
      %p39 = scmp.eq.s32.totalorder %s9, 5
      %p40 = por %p38, %p39
      %p41 = scmp.ne.s32.totalorder %s33, %s36
      %p42 = scmp.eq.s32.totalorder %s9, 0
      %p43 = por %p41, %p42
      %p44 = scmp.ne.s32.totalorder %s33, %s36
      %p45 = scmp.eq.s32.totalorder %s14, 5
      %p46 = por %p44, %p45
      %p47 = scmp.ne.s32.totalorder %s36, %s37
      %p48 = scmp.eq.s32.totalorder %s14, 0
      %p49 = por %p47, %p48
      %p50 = scmp.ne.s32.totalorder %s36, %s37
      %p51 = scmp.eq.s32.totalorder %s15, 5
      %p52 = por %p50, %p51
      %p54 = scmp.ne.s32.totalorder %s37, %s53
      %p55 = scmp.eq.s32.totalorder %s15, 0
      %p56 = por %p54, %p55
      %s58 = sadd.s32 %s57, 1
      %p61 = scmp.eq.s32.totalorder %s9, 5
      %p62 = scmp.ne.s32.totalorder %s57, %s59
      %p63 = scmp.eq.s32.totalorder %s9, 0
      %p64 = por %p62, %p63
      %p65 = scmp.ne.s32.totalorder %s57, %s59
      %p66 = scmp.eq.s32.totalorder %s14, 5
      %p67 = por %p65, %p66
      %p68 = scmp.ne.s32.totalorder %s59, %s60
      %p69 = scmp.eq.s32.totalorder %s14, 0
      %p70 = por %p68, %p69
      %p71 = scmp.ne.s32.totalorder %s59, %s60
      %p72 = scmp.eq.s32.totalorder %s15, 5
      %p73 = por %p71, %p72
      %p75 = scmp.ne.s32.totalorder %s60, %s74
      %p76 = scmp.eq.s32.totalorder %s15, 0
      %p77 = por %p75, %p76
      %s79 = sadd.s32 %s78, 1
      %p82 = scmp.eq.s32.totalorder %s9, 5
      %p83 = scmp.ne.s32.totalorder %s78, %s80
      %p84 = scmp.eq.s32.totalorder %s9, 0
      %p85 = por %p83, %p84
      %p86 = scmp.ne.s32.totalorder %s78, %s80
      %p87 = scmp.eq.s32.totalorder %s14, 5
      %p88 = por %p86, %p87
      %p89 = scmp.ne.s32.totalorder %s80, %s81
      %p90 = scmp.eq.s32.totalorder %s14, 0
      %p91 = por %p89, %p90
      %p92 = scmp.ne.s32.totalorder %s80, %s81
      %p93 = scmp.eq.s32.totalorder %s15, 5
      %p94 = por %p92, %p93
      %p96 = scmp.ne.s32.totalorder %s81, %s95
      %p97 = scmp.eq.s32.totalorder %s15, 0
      %p98 = por %p96, %p97
      %s99 = ssub.s32 %s16, %s28
      %s100 = ssub.s32 %s17, %s24
      %s101 = sor.u32 %s99, %s100
      %p102 = scmp.eq.s32.totalorder %s101, 0
      %s104 = sadd.s32 %s103, 1
      %s105 = scalar_select %p102, %s103, %s104
      %p108 = pneg %p102
      %p109 = scmp.eq.s32.totalorder %s9, 5
      %p110 = por %p108, %p109
      %p111 = scmp.ne.s32.totalorder %s103, %s106
      %p112 = scmp.eq.s32.totalorder %s9, 0
      %p113 = por %p111, %p112
      %p114 = scmp.ne.s32.totalorder %s103, %s106
      %p115 = scmp.eq.s32.totalorder %s14, 5
      %p116 = por %p114, %p115
      %p117 = scmp.ne.s32.totalorder %s106, %s107
      %p118 = scmp.eq.s32.totalorder %s14, 0
      %p119 = por %p117, %p118
      %p120 = scmp.ne.s32.totalorder %s106, %s107
      %p121 = scmp.eq.s32.totalorder %s15, 5
      %p122 = por %p120, %p121
      %p124 = scmp.ne.s32.totalorder %s107, %s123
      %p125 = scmp.eq.s32.totalorder %s15, 0
      %p126 = por %p124, %p125
      %p127 = scmp.le.s32.totalorder 1, %s9
      %p128 = scmp.lt.s32.totalorder %s9, 7
      %p129 = pnand %p127, %p128
      %p130 = pneg %p129
      // Predicated region
      $region9: #{encoder_forward.1} parent=5 // pred_check
        _
      $region10: #{encoder_forward.1} parent=5 // pred_check_branch
        %132 = sbr.rel (%p129) target = $region12
      $region11: #{encoder_forward.1} parent=5 // pred_region
        %s133 = ssub.s32 %s9, 1
        // Predicated region
        $region13: #{encoder_forward.1} parent=11 // pred_check
          %p134 = pneg %p70
        $region14: #{encoder_forward.1} parent=11 // pred_check_branch
          %136 = sbr.rel (%p134) target = $region16
        $region15: #{encoder_forward.1} parent=11 // pred_region
          _
        $region16: #{encoder_forward.1} parent=11 // pred_fallthru
          _
        // Predicated region
        $region17: #{encoder_forward.1} parent=11 // pred_check
          %p137 = pneg %p91
        $region18: #{encoder_forward.1} parent=11 // pred_check_branch
          %139 = sbr.rel (%p137) target = $region20
        $region19: #{encoder_forward.1} parent=11 // pred_region
          _
        $region20: #{encoder_forward.1} parent=11 // pred_fallthru
          _
      $region12: #{encoder_forward.1} parent=5 // pred_fallthru
        _
      %p140 = scmp.lt.s32.totalorder %s9, 6
      // Predicated region
      $region21: #{encoder_forward.1} parent=5 // pred_check
        %p141 = pneg %p140
      $region22: #{encoder_forward.1} parent=5 // pred_check_branch
        %143 = sbr.rel (%p141) target = $region24
      $region23: #{encoder_forward.1} parent=5 // pred_region
        // Predicated region
        $region25: #{encoder_forward.1} parent=23 // pred_check
          %p144 = pneg %p43
        $region26: #{encoder_forward.1} parent=23 // pred_check_branch
          %146 = sbr.rel (%p144) target = $region28
        $region27: #{encoder_forward.1} parent=23 // pred_region
          %s147 = sand.u32 %s33, 1
          %s148 = sand.u32 %s33, 1
          %s149 = smul.addr %s148, 16
          %s150 = scalar_lea.vmem [#allocation2], %s149
          %s151 = smul.addr %s16, 6
          %s152 = sadd.s32 %s17, %s151
          %s153 = smul.addr %s152, 8
          %s154 = scalar_lea.vmem %s0, %s153
          // Predicated region
          $region29: #{encoder_forward.1} parent=27 // pred_check
            _
          $region30: #{encoder_forward.1} parent=27 // pred_check_branch
            %156 = sbr.rel (0) target = $region32
          $region31: #{encoder_forward.1} parent=27 // pred_region
            // Predicated region
            $region33: #{encoder_forward.1} parent=31 // pred_check
              _
            $region34: #{encoder_forward.1} parent=31 // pred_check_branch
              %158 = sbr.rel (0) target = $region36
            $region35: #{encoder_forward.1} parent=31 // pred_region
              // Predicated region
              $region48: #{encoder_forward.1} parent=35 // pred_check
                _
              $region49: #{encoder_forward.1} parent=35 // pred_check_branch
                %176 = sbr.rel (0) target = $region51
              $region50: #{encoder_forward.1} parent=35 // pred_region
                loop: start=0, step=1, limit=1
                $region52: #{encoder_forward.1} parent=50 // loop_pre_header
                  _
                $region53: #{encoder_forward.1} parent=50 // loop_header
                  %s178 = sphi 0, %s182
                  %p179 = scmp.ge.s32.totalorder %s178, 1
                  %s183 = sphi %s154, %s154
                  %s184 = sphi %s150, %s150
                $region54: #{encoder_forward.1} parent=50 // loop_header_branch
                  %181 = sbr.rel (%p179) target = $region58
                $region55: #{encoder_forward.1} parent=50 // loop_body
                  %v185 = vld [vmem:[%s183] sm:$0xff]
                  %186 = vst [vmem:[%s184] sm:$0xff] %v185
                  %v187 = vld [vmem:[%s183 + $0x18] sm:$0xff]
                  %188 = vst [vmem:[%s184 + $0x8] sm:$0xff] %v187
                $region56: #{encoder_forward.1} parent=50 // loop_footer
                  %s182 = sadd.s32 1, %s178
                $region57: #{encoder_forward.1} parent=50 // loop_footer_branch
                  %177 = sbr.rel target = $region53
                $region58: #{encoder_forward.1} parent=50 // loop_exit
                  _
              $region51: #{encoder_forward.1} parent=35 // pred_fallthru
                _
              // Predicated region
              $region59: #{encoder_forward.1} parent=35 // pred_check
                _
              $region60: #{encoder_forward.1} parent=35 // pred_check_branch
                %190 = sbr.rel target = $region62
              $region61: #{encoder_forward.1} parent=35 // pred_region
                _
              $region62: #{encoder_forward.1} parent=35 // pred_fallthru
                _
            $region36: #{encoder_forward.1} parent=31 // pred_fallthru
              _
            // Predicated region
            $region37: #{encoder_forward.1} parent=31 // pred_check
              _
            $region38: #{encoder_forward.1} parent=31 // pred_check_branch
              %160 = sbr.rel target = $region40
            $region39: #{encoder_forward.1} parent=31 // pred_region
              %s162 = ssub.s32 256, 1
              loop: start=0, step=1, limit=1
              $region41: #{encoder_forward.1} parent=39 // loop_pre_header
                _
              $region42: #{encoder_forward.1} parent=39 // loop_header
                %s164 = sphi 0, %s168
                %p165 = scmp.ge.s32.totalorder %s164, 1
                %s169 = sphi %s154, %s154
                %s170 = sphi %s150, %s150
              $region43: #{encoder_forward.1} parent=39 // loop_header_branch
                %167 = sbr.rel (%p165) target = $region47
              $region44: #{encoder_forward.1} parent=39 // loop_body
                %v171 = vld [vmem:[%s169] sm:%s162]
                %172 = vst [vmem:[%s170] sm:%s162] %v171
                %v173 = vld [vmem:[%s169 + $0x18] sm:%s162]
                %174 = vst [vmem:[%s170 + $0x8] sm:%s162] %v173
              $region45: #{encoder_forward.1} parent=39 // loop_footer
                %s168 = sadd.s32 1, %s164
              $region46: #{encoder_forward.1} parent=39 // loop_footer_branch
                %163 = sbr.rel target = $region42
              $region47: #{encoder_forward.1} parent=39 // loop_exit
                _
            $region40: #{encoder_forward.1} parent=31 // pred_fallthru
              _
          $region32: #{encoder_forward.1} parent=27 // pred_fallthru
            _
          %191 = vnop
        $region28: #{encoder_forward.1} parent=23 // pred_fallthru
          _
      $region24: #{encoder_forward.1} parent=5 // pred_fallthru
        _
      %p192 = scmp.le.s32.totalorder 1, %s9
      %p193 = scmp.lt.s32.totalorder %s9, 7
      %p194 = pnand %p192, %p193
      %p195 = pneg %p194
      // Predicated region
      $region63: #{encoder_forward.1} parent=5 // pred_check
        _
      $region64: #{encoder_forward.1} parent=5 // pred_check_branch
        %197 = sbr.rel (%p194) target = $region66
      $region65: #{encoder_forward.1} parent=5 // pred_region
        %s198 = ssub.s32 %s9, 1
        %s199 = sand.u32 %s36, 1
        %s200 = sand.u32 %s36, 1
        %s201 = smul.addr %s200, 16
        %s202 = scalar_lea.vmem [#allocation2], %s201
        // Predicated region
        $region67: #{encoder_forward.1} parent=65 // pred_check
          %p203 = pneg %p49
        $region68: #{encoder_forward.1} parent=65 // pred_check_branch
          %205 = sbr.rel (%p203) target = $region70
        $region69: #{encoder_forward.1} parent=65 // pred_region
          _
        $region70: #{encoder_forward.1} parent=65 // pred_fallthru
          _
        %s206 = sand.u32 %s36, 1
        %s207 = sand.u32 %s36, 1
        %s208 = smul.addr %s207, 16
        %s209 = scalar_lea.vmem [#allocation2], %s208
        %p210 = pneg %p49
        %p211 = pneg %p46
        %p212 = pneg %p70
        %p213 = pneg %p67
        %p214 = pneg %p91
        %p215 = pneg %p88
        %p216 = pneg %p119
        %p217 = pneg %p116
        %s218 = sand.u32 %s106, 1
        %s219 = sand.u32 %s106, 1
        %s220 = smul.addr %s219, 128
        %s221 = scalar_lea.vmem [#allocation3], %s220
        %v222 = vld [vmem:[%s1] sm:$0xff]
        %v223 = vld [vmem:[%s1 + $0x8] sm:$0xff]
        %v224 = vld [vmem:[%s1 + $0x10] sm:$0xff]
        %v225 = vld [vmem:[%s1 + $0x18] sm:$0xff]
        %v226 = vld [vmem:[%s1 + $0x20] sm:$0xff]
        %v227 = vld [vmem:[%s1 + $0x28] sm:$0xff]
        %v228 = vld [vmem:[%s1 + $0x30] sm:$0xff]
        %v229 = vld [vmem:[%s1 + $0x38] sm:$0xff]
        %v230 = vld [vmem:[%s1 + $0x40] sm:$0xff]
        %v231 = vld [vmem:[%s1 + $0x48] sm:$0xff]
        %v232 = vld [vmem:[%s1 + $0x50] sm:$0xff]
        %v233 = vld [vmem:[%s1 + $0x58] sm:$0xff]
        %v234 = vld [vmem:[%s1 + $0x60] sm:$0xff]
        %v235 = vld [vmem:[%s1 + $0x68] sm:$0xff]
        %v236 = vld [vmem:[%s1 + $0x70] sm:$0xff]
        %v237 = vld [vmem:[%s1 + $0x78] sm:$0xff]
        %v238 = vld [vmem:[%s202] sm:$0xff]
        %v239 = vld [vmem:[%s202 + $0x8] sm:$0xff]
        %v240 = vld [vmem:[%s2] sm:$0xff]
        %v241 = vld [vmem:[%s2 + $0x8] sm:$0xff]
        %v242 = vld [vmem:[%s2 + $0x10] sm:$0xff]
        %v243 = vld [vmem:[%s2 + $0x18] sm:$0xff]
        %v244 = vld [vmem:[%s2 + $0x20] sm:$0xff]
        %v245 = vld [vmem:[%s2 + $0x28] sm:$0xff]
        %v246 = vld [vmem:[%s2 + $0x30] sm:$0xff]
        %v247 = vld [vmem:[%s2 + $0x38] sm:$0xff]
        %v248 = vld [vmem:[%s2 + $0x40] sm:$0xff]
        %v249 = vld [vmem:[%s2 + $0x48] sm:$0xff]
        %v250 = vld [vmem:[%s2 + $0x50] sm:$0xff]
        %v251 = vld [vmem:[%s2 + $0x58] sm:$0xff]
        %v252 = vld [vmem:[%s2 + $0x60] sm:$0xff]
        %v253 = vld [vmem:[%s2 + $0x68] sm:$0xff]
        %v254 = vld [vmem:[%s2 + $0x70] sm:$0xff]
        %v255 = vld [vmem:[%s2 + $0x78] sm:$0xff]
        %257 = vset.pattern.permute.xlu0 0
        %258 = vperm.xlu0 %257, %v240
        %v259 = vpop.permute.xlu0 %258
        %262 = vset.pattern.permute.xlu0 0
        %263 = vperm.xlu0 %262, %v241
        %v264 = vpop.permute.xlu0 %263
        %267 = vset.pattern.permute.xlu0 0
        %268 = vperm.xlu0 %267, %v242
        %v269 = vpop.permute.xlu0 %268
        %272 = vset.pattern.permute.xlu0 0
        %273 = vperm.xlu0 %272, %v243
        %v274 = vpop.permute.xlu0 %273
        %277 = vset.pattern.permute.xlu0 0
        %278 = vperm.xlu0 %277, %v244
        %v279 = vpop.permute.xlu0 %278
        %282 = vset.pattern.permute.xlu0 0
        %283 = vperm.xlu0 %282, %v245
        %v284 = vpop.permute.xlu0 %283
        %287 = vset.pattern.permute.xlu0 0
        %288 = vperm.xlu0 %287, %v246
        %v289 = vpop.permute.xlu0 %288
        %292 = vset.pattern.permute.xlu0 0
        %293 = vperm.xlu0 %292, %v247
        %v294 = vpop.permute.xlu0 %293
        %297 = vset.pattern.permute.xlu0 0
        %298 = vperm.xlu0 %297, %v248
        %v299 = vpop.permute.xlu0 %298
        %302 = vset.pattern.permute.xlu0 0
        %303 = vperm.xlu0 %302, %v249
        %v304 = vpop.permute.xlu0 %303
        %307 = vset.pattern.permute.xlu0 0
        %308 = vperm.xlu0 %307, %v250
        %v309 = vpop.permute.xlu0 %308
        %312 = vset.pattern.permute.xlu0 0
        %313 = vperm.xlu0 %312, %v251
        %v314 = vpop.permute.xlu0 %313
        %317 = vset.pattern.permute.xlu0 0
        %318 = vperm.xlu0 %317, %v252
        %v319 = vpop.permute.xlu0 %318
        %322 = vset.pattern.permute.xlu0 0
        %323 = vperm.xlu0 %322, %v253
        %v324 = vpop.permute.xlu0 %323
        %327 = vset.pattern.permute.xlu0 0
        %328 = vperm.xlu0 %327, %v254
        %v329 = vpop.permute.xlu0 %328
        %332 = vset.pattern.permute.xlu0 0
        %333 = vperm.xlu0 %332, %v255
        %v334 = vpop.permute.xlu0 %333
        %vm336 = vcmask 130048
        %v338 = vsel %vm336, %v222, 0
        %v341 = vsel %vm336, %v223, 0
        %v344 = vsel %vm336, %v224, 0
        %v347 = vsel %vm336, %v225, 0
        %v350 = vsel %vm336, %v226, 0
        %v353 = vsel %vm336, %v227, 0
        %v356 = vsel %vm336, %v228, 0
        %v359 = vsel %vm336, %v229, 0
        %v362 = vsel %vm336, %v230, 0
        %v365 = vsel %vm336, %v231, 0
        %v368 = vsel %vm336, %v232, 0
        %v371 = vsel %vm336, %v233, 0
        %v374 = vsel %vm336, %v234, 0
        %v377 = vsel %vm336, %v235, 0
        %v380 = vsel %vm336, %v236, 0
        %v383 = vsel %vm336, %v237, 0
        %385 = vmatprep.subr.mxu0 0.0
        %386 = vmatpush1.msra.mxu0 0.0
        %387 = vmatprep.subr.mxu0 0.0
        %388 = vmatpush1.msra.mxu0 0.0
        %389 = vmatprep.subr.mxu0 0.0
        %390 = vmatpush1.msra.mxu0 0.0
        %391 = vmatprep.subr.mxu0 0.0
        %392 = vmatpush1.msra.mxu0 0.0
        %393 = vmatprep.subr.mxu0 0.0
        %394 = vmatpush1.msra.mxu0 0.0
        %395 = vmatprep.subr.mxu0 0.0
        %396 = vmatpush1.msra.mxu0 0.0
        %397 = vmatprep.subr.mxu0 0.0
        %398 = vmatpush1.msra.mxu0 0.0
        %399 = vmatprep.subr.mxu0 0.0
        %400 = vmatpush1.msra.mxu0 0.0
        %401 = vmatprep.subr.mxu0 0.0
        %402 = vmatpush1.msra.mxu0 0.0
        %403 = vmatprep.subr.mxu0 0.0
        %404 = vmatpush1.msra.mxu0 0.0
        %405 = vmatprep.subr.mxu0 0.0
        %406 = vmatpush1.msra.mxu0 0.0
        %407 = vmatprep.subr.mxu0 0.0
        %408 = vmatpush1.msra.mxu0 0.0
        %409 = vmatprep.subr.mxu0 0.0
        %410 = vmatpush1.msra.mxu0 0.0
        %411 = vmatprep.subr.mxu0 0.0
        %412 = vmatpush1.msra.mxu0 0.0
        %413 = vmatprep.subr.mxu0 0.0
        %414 = vmatpush1.msra.mxu0 %v239
        %415 = vmatprep.subr.mxu0 0.0
        %416 = vmatpush1.msra.mxu0 %v238
        %417 = vmatprep.subr.mxu0 0.0
        %418 = vmatpush2.msra.mxu0 0.0
        %419 = vmatprep.subr.mxu0 0.0
        %420 = vmatpush2.msra.mxu0 0.0
        %421 = vmatprep.subr.mxu0 0.0
        %422 = vmatpush2.msra.mxu0 0.0
        %423 = vmatprep.subr.mxu0 0.0
        %424 = vmatpush2.msra.mxu0 0.0
        %425 = vmatprep.subr.mxu0 0.0
        %426 = vmatpush2.msra.mxu0 0.0
        %427 = vmatprep.subr.mxu0 0.0
        %428 = vmatpush2.msra.mxu0 0.0
        %429 = vmatprep.subr.mxu0 0.0
        %430 = vmatpush2.msra.mxu0 0.0
        %431 = vmatprep.subr.mxu0 0.0
        %432 = vmatpush2.msra.mxu0 0.0
        %433 = vmatprep.subr.mxu0 0.0
        %434 = vmatpush2.msra.mxu0 0.0
        %435 = vmatprep.subr.mxu0 0.0
        %436 = vmatpush2.msra.mxu0 0.0
        %437 = vmatprep.subr.mxu0 0.0
        %438 = vmatpush2.msra.mxu0 0.0
        %439 = vmatprep.subr.mxu0 0.0
        %440 = vmatpush2.msra.mxu0 0.0
        %441 = vmatprep.subr.mxu0 0.0
        %442 = vmatpush2.msra.mxu0 0.0
        %443 = vmatprep.subr.mxu0 0.0
        %444 = vmatpush2.msra.mxu0 0.0
        %445 = vmatprep.subr.mxu0 0.0
        %446 = vmatpush2.msra.mxu0 0.0
        %447 = vmatprep.subr.mxu0 0.0
        %448 = vmatpush2.msra.mxu0 0.0
        %449 = vmatprep.mubr.f32.mxu0 0.0
        %450 = vmatmul.mubr.f32.gmra.mxu0 %v338
        %v451 = vpop.f32.mrf.mxu0
        %v452 = vadd.f32 %v259, %v451
        %v453 = vpop.f32.mrf.mxu0
        %454 = vmatprep.mubr.f32.mxu0 0.0
        %455 = vmatmul.mubr.f32.gmra.mxu0 %v341
        %v456 = vpop.f32.mrf.mxu0
        %v457 = vadd.f32 %v264, %v456
        %v458 = vpop.f32.mrf.mxu0
        %459 = vmatprep.mubr.f32.mxu0 0.0
        %460 = vmatmul.mubr.f32.gmra.mxu0 %v344
        %v461 = vpop.f32.mrf.mxu0
        %v462 = vadd.f32 %v269, %v461
        %v463 = vpop.f32.mrf.mxu0
        %464 = vmatprep.mubr.f32.mxu0 0.0
        %465 = vmatmul.mubr.f32.gmra.mxu0 %v347
        %v466 = vpop.f32.mrf.mxu0
        %v467 = vadd.f32 %v274, %v466
        %v468 = vpop.f32.mrf.mxu0
        %469 = vmatprep.mubr.f32.mxu0 0.0
        %470 = vmatmul.mubr.f32.gmra.mxu0 %v350
        %v471 = vpop.f32.mrf.mxu0
        %v472 = vadd.f32 %v279, %v471
        %v473 = vpop.f32.mrf.mxu0
        %474 = vmatprep.mubr.f32.mxu0 0.0
        %475 = vmatmul.mubr.f32.gmra.mxu0 %v353
        %v476 = vpop.f32.mrf.mxu0
        %v477 = vadd.f32 %v284, %v476
        %v478 = vpop.f32.mrf.mxu0
        %479 = vmatprep.mubr.f32.mxu0 0.0
        %480 = vmatmul.mubr.f32.gmra.mxu0 %v356
        %v481 = vpop.f32.mrf.mxu0
        %v482 = vadd.f32 %v289, %v481
        %v483 = vpop.f32.mrf.mxu0
        %484 = vmatprep.mubr.f32.mxu0 0.0
        %485 = vmatmul.mubr.f32.gmra.mxu0 %v359
        %v486 = vpop.f32.mrf.mxu0
        %v487 = vadd.f32 %v294, %v486
        %v488 = vpop.f32.mrf.mxu0
        %489 = vmatprep.mubr.f32.mxu0 0.0
        %490 = vmatmul.mubr.f32.gmra.mxu0 %v362
        %v491 = vpop.f32.mrf.mxu0
        %v492 = vadd.f32 %v299, %v491
        %v493 = vpop.f32.mrf.mxu0
        %494 = vmatprep.mubr.f32.mxu0 0.0
        %495 = vmatmul.mubr.f32.gmra.mxu0 %v365
        %v496 = vpop.f32.mrf.mxu0
        %v497 = vadd.f32 %v304, %v496
        %v498 = vpop.f32.mrf.mxu0
        %499 = vmatprep.mubr.f32.mxu0 0.0
        %500 = vmatmul.mubr.f32.gmra.mxu0 %v368
        %v501 = vpop.f32.mrf.mxu0
        %v502 = vadd.f32 %v309, %v501
        %v503 = vpop.f32.mrf.mxu0
        %504 = vmatprep.mubr.f32.mxu0 0.0
        %505 = vmatmul.mubr.f32.gmra.mxu0 %v371
        %v506 = vpop.f32.mrf.mxu0
        %v507 = vadd.f32 %v314, %v506
        %v508 = vpop.f32.mrf.mxu0
        %509 = vmatprep.mubr.f32.mxu0 0.0
        %510 = vmatmul.mubr.f32.gmra.mxu0 %v374
        %v511 = vpop.f32.mrf.mxu0
        %v512 = vadd.f32 %v319, %v511
        %v513 = vpop.f32.mrf.mxu0
        %514 = vmatprep.mubr.f32.mxu0 0.0
        %515 = vmatmul.mubr.f32.gmra.mxu0 %v377
        %v516 = vpop.f32.mrf.mxu0
        %v517 = vadd.f32 %v324, %v516
        %v518 = vpop.f32.mrf.mxu0
        %519 = vmatprep.mubr.f32.mxu0 0.0
        %520 = vmatmul.mubr.f32.gmra.mxu0 %v380
        %v521 = vpop.f32.mrf.mxu0
        %v522 = vadd.f32 %v329, %v521
        %v523 = vpop.f32.mrf.mxu0
        %524 = vmatprep.mubr.f32.mxu0 0.0
        %525 = vmatmul.mubr.f32.gmra.mxu0 %v383
        %v526 = vpop.f32.mrf.mxu0
        %v527 = vadd.f32 %v334, %v526
        %v528 = vpop.f32.mrf.mxu0
        %529 = vdwg.mxu0
        %530 = vst [vmem:[%s221] sm:$0xff] %v452
        %531 = vst [vmem:[%s221 + $0x8] sm:$0xff] %v457
        %532 = vst [vmem:[%s221 + $0x10] sm:$0xff] %v462
        %533 = vst [vmem:[%s221 + $0x18] sm:$0xff] %v467
        %534 = vst [vmem:[%s221 + $0x20] sm:$0xff] %v472
        %535 = vst [vmem:[%s221 + $0x28] sm:$0xff] %v477
        %536 = vst [vmem:[%s221 + $0x30] sm:$0xff] %v482
        %537 = vst [vmem:[%s221 + $0x38] sm:$0xff] %v487
        %538 = vst [vmem:[%s221 + $0x40] sm:$0xff] %v492
        %539 = vst [vmem:[%s221 + $0x48] sm:$0xff] %v497
        %540 = vst [vmem:[%s221 + $0x50] sm:$0xff] %v502
        %541 = vst [vmem:[%s221 + $0x58] sm:$0xff] %v507
        %542 = vst [vmem:[%s221 + $0x60] sm:$0xff] %v512
        %543 = vst [vmem:[%s221 + $0x68] sm:$0xff] %v517
        %544 = vst [vmem:[%s221 + $0x70] sm:$0xff] %v522
        %545 = vst [vmem:[%s221 + $0x78] sm:$0xff] %v527
        %s546 = sand.u32 %s106, 1
        %s547 = sand.u32 %s106, 1
        %s548 = smul.addr %s547, 128
        %s549 = scalar_lea.vmem [#allocation3], %s548
        // Predicated region
        $region71: #{encoder_forward.1} parent=65 // pred_check
          %p550 = pneg %p116
        $region72: #{encoder_forward.1} parent=65 // pred_check_branch
          %552 = sbr.rel (%p550) target = $region74
        $region73: #{encoder_forward.1} parent=65 // pred_region
          %s553 = smul.addr %s18, 48
          %s554 = sadd.s32 %s19, %s553
          %s555 = smul.addr %s554, 8
          %s556 = scalar_lea.vmem %s3, %s555
          // Predicated region
          $region75: #{encoder_forward.1} parent=73 // pred_check
            _
          $region76: #{encoder_forward.1} parent=73 // pred_check_branch
            %558 = sbr.rel (0) target = $region78
          $region77: #{encoder_forward.1} parent=73 // pred_region
            // Predicated region
            $region79: #{encoder_forward.1} parent=77 // pred_check
              _
            $region80: #{encoder_forward.1} parent=77 // pred_check_branch
              %560 = sbr.rel (0) target = $region82
            $region81: #{encoder_forward.1} parent=77 // pred_region
              // Predicated region
              $region94: #{encoder_forward.1} parent=81 // pred_check
                _
              $region95: #{encoder_forward.1} parent=81 // pred_check_branch
                %606 = sbr.rel (0) target = $region97
              $region96: #{encoder_forward.1} parent=81 // pred_region
                loop: start=0, step=1, limit=1
                $region98: #{encoder_forward.1} parent=96 // loop_pre_header
                  _
                $region99: #{encoder_forward.1} parent=96 // loop_header
                  %s608 = sphi 0, %s612
                  %p609 = scmp.ge.s32.totalorder %s608, 1
                  %s613 = sphi %s549, %s549
                  %s614 = sphi %s556, %s556
                $region100: #{encoder_forward.1} parent=96 // loop_header_branch
                  %611 = sbr.rel (%p609) target = $region104
                $region101: #{encoder_forward.1} parent=96 // loop_body
                  %v615 = vld [vmem:[%s613] sm:$0xff]
                  %616 = vst [vmem:[%s614] sm:$0xff] %v615
                  %v617 = vld [vmem:[%s613 + $0x8] sm:$0xff]
                  %618 = vst [vmem:[%s614 + $0x18] sm:$0xff] %v617
                  %v619 = vld [vmem:[%s613 + $0x10] sm:$0xff]
                  %620 = vst [vmem:[%s614 + $0x30] sm:$0xff] %v619
                  %v621 = vld [vmem:[%s613 + $0x18] sm:$0xff]
                  %622 = vst [vmem:[%s614 + $0x48] sm:$0xff] %v621
                  %v623 = vld [vmem:[%s613 + $0x20] sm:$0xff]
                  %624 = vst [vmem:[%s614 + $0x60] sm:$0xff] %v623
                  %v625 = vld [vmem:[%s613 + $0x28] sm:$0xff]
                  %626 = vst [vmem:[%s614 + $0x78] sm:$0xff] %v625
                  %v627 = vld [vmem:[%s613 + $0x30] sm:$0xff]
                  %628 = vst [vmem:[%s614 + $0x90] sm:$0xff] %v627
                  %v629 = vld [vmem:[%s613 + $0x38] sm:$0xff]
                  %630 = vst [vmem:[%s614 + $0xa8] sm:$0xff] %v629
                  %v631 = vld [vmem:[%s613 + $0x40] sm:$0xff]
                  %632 = vst [vmem:[%s614 + $0xc0] sm:$0xff] %v631
                  %v633 = vld [vmem:[%s613 + $0x48] sm:$0xff]
                  %634 = vst [vmem:[%s614 + $0xd8] sm:$0xff] %v633
                  %v635 = vld [vmem:[%s613 + $0x50] sm:$0xff]
                  %636 = vst [vmem:[%s614 + $0xf0] sm:$0xff] %v635
                  %v637 = vld [vmem:[%s613 + $0x58] sm:$0xff]
                  %638 = vst [vmem:[%s614 + $0x108] sm:$0xff] %v637
                  %v639 = vld [vmem:[%s613 + $0x60] sm:$0xff]
                  %640 = vst [vmem:[%s614 + $0x120] sm:$0xff] %v639
                  %v641 = vld [vmem:[%s613 + $0x68] sm:$0xff]
                  %642 = vst [vmem:[%s614 + $0x138] sm:$0xff] %v641
                  %v643 = vld [vmem:[%s613 + $0x70] sm:$0xff]
                  %644 = vst [vmem:[%s614 + $0x150] sm:$0xff] %v643
                  %v645 = vld [vmem:[%s613 + $0x78] sm:$0xff]
                  %646 = vst [vmem:[%s614 + $0x168] sm:$0xff] %v645
                $region102: #{encoder_forward.1} parent=96 // loop_footer
                  %s612 = sadd.s32 1, %s608
                $region103: #{encoder_forward.1} parent=96 // loop_footer_branch
                  %607 = sbr.rel target = $region99
                $region104: #{encoder_forward.1} parent=96 // loop_exit
                  _
              $region97: #{encoder_forward.1} parent=81 // pred_fallthru
                _
              // Predicated region
              $region105: #{encoder_forward.1} parent=81 // pred_check
                _
              $region106: #{encoder_forward.1} parent=81 // pred_check_branch
                %648 = sbr.rel target = $region108
              $region107: #{encoder_forward.1} parent=81 // pred_region
                _
              $region108: #{encoder_forward.1} parent=81 // pred_fallthru
                _
            $region82: #{encoder_forward.1} parent=77 // pred_fallthru
              _
            // Predicated region
            $region83: #{encoder_forward.1} parent=77 // pred_check
              _
            $region84: #{encoder_forward.1} parent=77 // pred_check_branch
              %562 = sbr.rel target = $region86
            $region85: #{encoder_forward.1} parent=77 // pred_region
              %s564 = ssub.s32 256, 1
              loop: start=0, step=1, limit=1
              $region87: #{encoder_forward.1} parent=85 // loop_pre_header
                _
              $region88: #{encoder_forward.1} parent=85 // loop_header
                %s566 = sphi 0, %s570
                %p567 = scmp.ge.s32.totalorder %s566, 1
                %s571 = sphi %s549, %s549
                %s572 = sphi %s556, %s556
              $region89: #{encoder_forward.1} parent=85 // loop_header_branch
                %569 = sbr.rel (%p567) target = $region93
              $region90: #{encoder_forward.1} parent=85 // loop_body
                %v573 = vld [vmem:[%s571] sm:%s564]
                %574 = vst [vmem:[%s572] sm:%s564] %v573
                %v575 = vld [vmem:[%s571 + $0x8] sm:%s564]
                %576 = vst [vmem:[%s572 + $0x18] sm:%s564] %v575
                %v577 = vld [vmem:[%s571 + $0x10] sm:%s564]
                %578 = vst [vmem:[%s572 + $0x30] sm:%s564] %v577
                %v579 = vld [vmem:[%s571 + $0x18] sm:%s564]
                %580 = vst [vmem:[%s572 + $0x48] sm:%s564] %v579
                %v581 = vld [vmem:[%s571 + $0x20] sm:%s564]
                %582 = vst [vmem:[%s572 + $0x60] sm:%s564] %v581
                %v583 = vld [vmem:[%s571 + $0x28] sm:%s564]
                %584 = vst [vmem:[%s572 + $0x78] sm:%s564] %v583
                %v585 = vld [vmem:[%s571 + $0x30] sm:%s564]
                %586 = vst [vmem:[%s572 + $0x90] sm:%s564] %v585
                %v587 = vld [vmem:[%s571 + $0x38] sm:%s564]
                %588 = vst [vmem:[%s572 + $0xa8] sm:%s564] %v587
                %v589 = vld [vmem:[%s571 + $0x40] sm:%s564]
                %590 = vst [vmem:[%s572 + $0xc0] sm:%s564] %v589
                %v591 = vld [vmem:[%s571 + $0x48] sm:%s564]
                %592 = vst [vmem:[%s572 + $0xd8] sm:%s564] %v591
                %v593 = vld [vmem:[%s571 + $0x50] sm:%s564]
                %594 = vst [vmem:[%s572 + $0xf0] sm:%s564] %v593
                %v595 = vld [vmem:[%s571 + $0x58] sm:%s564]
                %596 = vst [vmem:[%s572 + $0x108] sm:%s564] %v595
                %v597 = vld [vmem:[%s571 + $0x60] sm:%s564]
                %598 = vst [vmem:[%s572 + $0x120] sm:%s564] %v597
                %v599 = vld [vmem:[%s571 + $0x68] sm:%s564]
                %600 = vst [vmem:[%s572 + $0x138] sm:%s564] %v599
                %v601 = vld [vmem:[%s571 + $0x70] sm:%s564]
                %602 = vst [vmem:[%s572 + $0x150] sm:%s564] %v601
                %v603 = vld [vmem:[%s571 + $0x78] sm:%s564]
                %604 = vst [vmem:[%s572 + $0x168] sm:%s564] %v603
              $region91: #{encoder_forward.1} parent=85 // loop_footer
                %s570 = sadd.s32 1, %s566
              $region92: #{encoder_forward.1} parent=85 // loop_footer_branch
                %565 = sbr.rel target = $region88
              $region93: #{encoder_forward.1} parent=85 // loop_exit
                _
            $region86: #{encoder_forward.1} parent=77 // pred_fallthru
              _
          $region78: #{encoder_forward.1} parent=73 // pred_fallthru
            _
          %649 = vnop
        $region74: #{encoder_forward.1} parent=65 // pred_fallthru
          _
      $region66: #{encoder_forward.1} parent=5 // pred_fallthru
        _
      %p650 = scmp.le.s32.totalorder 2, %s9
      // Predicated region
      $region109: #{encoder_forward.1} parent=5 // pred_check
        %p651 = pneg %p650
      $region110: #{encoder_forward.1} parent=5 // pred_check_branch
        %653 = sbr.rel (%p651) target = $region112
      $region111: #{encoder_forward.1} parent=5 // pred_region
        %s654 = ssub.s32 %s9, 2
        // Predicated region
        $region113: #{encoder_forward.1} parent=111 // pred_check
          %p655 = pneg %p122
        $region114: #{encoder_forward.1} parent=111 // pred_check_branch
          %657 = sbr.rel (%p655) target = $region116
        $region115: #{encoder_forward.1} parent=111 // pred_region
          %s658 = sand.u32 %s107, 1
          %s659 = sand.u32 %s107, 1
          %s660 = smul.addr %s659, 128
          %s661 = scalar_lea.vmem [#allocation3], %s660
        $region116: #{encoder_forward.1} parent=111 // pred_fallthru
          _
      $region112: #{encoder_forward.1} parent=5 // pred_fallthru
        _
    $region6: #{encoder_forward.1} parent=1 // loop_footer
      %s13 = sadd.s32 1, %s9
    $region7: #{encoder_forward.1} parent=1 // loop_footer_branch
      %8 = sbr.rel target = $region3
    $region8: #{encoder_forward.1} parent=1 // loop_exit
      _

</llo_original>
